<compile_context>
chip_gen: v7x
topology: tpu7x:2x2x1
jax: 0.10.0
libtpu: 0.0.40
codegen_flags: <defaults>
</compile_context>

<pallas_src>
import jax
import jax.numpy as jnp
from jax.experimental import pallas as pl
from jax.experimental.pallas import tpu as pltpu


def _swish_kernel(x_ref, o_ref):
    x = x_ref[...]
    xf = x.astype(jnp.float32)           # compute in f32 (free: mem-bound)
    y = xf * jax.nn.sigmoid(xf)          # sigmoid -> EUP, mul -> VPU
    o_ref[...] = y.astype(o_ref.dtype)   # single full-tile lane-dense store


_LANE = 128
# 8192 rows x 128 lanes x 4 B = 4 MiB per f32 input block; with default
# double-buffering (2x in + 2x out) that's ~16 MiB VMEM — safe on all gens.
_BLOCK_ROWS = 8192


def swish(x):
    """Elementwise x * sigmoid(x) for any shape / float dtype."""
    orig_shape = x.shape
    n = x.size
    if n == 0:
        return x

    # Flatten and pad so the lane (last) dim is exactly 128 -> unmasked stores.
    # For the common case n % 128 == 0 this is a free reshape (no copy).
    rows = pl.cdiv(n, _LANE)
    pad = rows * _LANE - n
    flat = jnp.ravel(x)
    if pad:
        flat = jnp.pad(flat, (0, pad))   # swish(0) == 0, padding is harmless
    x2d = flat.reshape(rows, _LANE)

    if rows <= _BLOCK_ROWS:
        # Small case: single gridless block (block == full array, so no
        # (8,128) divisibility requirement). No per-step grid overhead.
        out = pl.pallas_call(
            _swish_kernel,
            out_shape=jax.ShapeDtypeStruct((rows, _LANE), x.dtype),
            in_specs=[pl.BlockSpec((rows, _LANE), lambda: (0, 0))],
            out_specs=pl.BlockSpec((rows, _LANE), lambda: (0, 0)),
            compiler_params=pltpu.CompilerParams(
                vmem_limit_bytes=32 * 1024 * 1024),
        )(x2d)
    else:
        # Large case: tile rows in ~4 MiB blocks. The ragged final block is
        # handled by Pallas (masked writes), so there is NO row padding and
        # hence no extra HBM copy. "parallel" axis for megacore sharding.
        out = pl.pallas_call(
            _swish_kernel,
            out_shape=jax.ShapeDtypeStruct((rows, _LANE), x.dtype),
            grid_spec=pltpu.PrefetchScalarGridSpec(
                num_scalar_prefetch=0,
                grid=(pl.cdiv(rows, _BLOCK_ROWS),),
                in_specs=[pl.BlockSpec((_BLOCK_ROWS, _LANE),
                                       lambda i: (i, 0))],
                out_specs=pl.BlockSpec((_BLOCK_ROWS, _LANE),
                                       lambda i: (i, 0)),
            ),
            compiler_params=pltpu.CompilerParams(
                dimension_semantics=("parallel",),
                vmem_limit_bytes=32 * 1024 * 1024),
        )(x2d)

    if pad:
        return out.reshape(-1)[:n].reshape(orig_shape)
    return out.reshape(orig_shape)


def reference_swish(x):
    return x * jax.nn.sigmoid(x)


if __name__ == "__main__":
    key = jax.random.PRNGKey(0)

    # Primary case consistent with the module: small 4-D activation tensor.
    x = jax.random.normal(key, (2, 4, 16, 16), dtype=jnp.float32)
    out = jax.block_until_ready(swish(x))
    ref = reference_swish(x)
    assert out.shape == x.shape
    assert jnp.allclose(out, ref, atol=1e-6, rtol=1e-6)

    # Non-128-multiple size -> exercises the lane-padding path.
    x2 = jax.random.normal(key, (3, 7, 7), dtype=jnp.float32)
    out2 = jax.block_until_ready(swish(x2))
    assert jnp.allclose(out2, reference_swish(x2), atol=1e-6, rtol=1e-6)

    # Size large enough to hit the gridded path with a ragged final block
    # (rows > 8192 and not a multiple of the block rows) and lane padding.
    n3 = _BLOCK_ROWS * _LANE + 12345
    x3 = jax.random.normal(key, (n3,), dtype=jnp.float32)
    out3 = jax.block_until_ready(swish(x3))
    assert jnp.allclose(out3, reference_swish(x3), atol=1e-6, rtol=1e-6)

    # bf16 input: kernel computes in f32 internally, casts back on store.
    x4 = jax.random.normal(key, (2, 4, 16, 16), dtype=jnp.bfloat16)
    out4 = jax.block_until_ready(swish(x4))
    ref4 = reference_swish(x4.astype(jnp.float32)).astype(jnp.bfloat16)
    assert jnp.allclose(out4.astype(jnp.float32), ref4.astype(jnp.float32),
                        atol=2e-2, rtol=2e-2)

    print("KERNEL_OK")
</pallas_src>

<mosaic_0001>
module attributes {stable_mosaic.version = 11 : i64} {
  func.func @_swish_kernel(%arg0: memref<16x128xf32, #tpu.memory_space<vmem>>, %arg1: memref<16x128xf32, #tpu.memory_space<vmem>>) attributes {dimension_semantics = [], scalar_prefetch = 0 : i64, scratch_operands = 0 : i64, tpu.core_type = #tpu.core_type<tc>} {
    %c0 = arith.constant 0 : index
    %c0_0 = arith.constant 0 : index
    %0 = vector.load %arg0[%c0, %c0_0] : memref<16x128xf32, #tpu.memory_space<vmem>>, vector<16x128xf32>
    %1 = arith.negf %0 : vector<16x128xf32>
    %2 = math.exp %1 : vector<16x128xf32>
    %cst = arith.constant 1.000000e+00 : f32
    %3 = vector.broadcast %cst : f32 to vector<16x128xf32>
    %4 = arith.addf %3, %2 : vector<16x128xf32>
    %5 = arith.divf %3, %4 : vector<16x128xf32>
    %6 = arith.mulf %0, %5 : vector<16x128xf32>
    %c0_1 = arith.constant 0 : index
    %c0_2 = arith.constant 0 : index
    %7 = vector.load %arg1[%c0_1, %c0_2] : memref<16x128xf32, #tpu.memory_space<vmem>>, vector<16x128xf32>
    tpu.vector_store %arg1[%c0_1, %c0_2], %6 {strides = array<i32>} : memref<16x128xf32, #tpu.memory_space<vmem>>, vector<16x128xf32>,
    return
  }
}

</mosaic_0001>

<llo_original>
// kernel: tpu_custom_call.1
$region0: #{tpu_custom_call.1}
  #allocation0 [shape = 'u32[]', space=smem, size = 0x4, offset = 0x4, fixed_abs, tag = 'smem constant byte address 0x4 - core index']
  #allocation1 [shape = 'u32[144,128]{1,0:T(1,128)}', space=vmem, size = 0x12000, scoped, tag = 'internal scratch']
  %s0 = inlined_call_operand.hbm [shape: f32[16,128], index: 0, kind: input, shape index: {}]
  %s1 = inlined_call_operand.hbm [shape: f32[16,128], index: 1, kind: output, shape index: {}]
  %s2 = sld [smem:[#allocation0]]
  $region18: #{tpu_custom_call.1} parent=0
    _
  %s4 = ssub.s32 1, %s2
  %s5 = scalar_select 0, %s4, %s2
  $region1: #{tpu_custom_call.1} parent=0
    #allocation2 [shape = 'u8[8192]{0}', space=vmem, size = 0x2000, scoped, tag = 'input window, operand 0, single buffered']
    #allocation3 [shape = 's32[1]{0}', space=sflag, size = 0x4, scoped, tag = 'scoped memory for tpu_custom_call.1']
    #allocation4 [shape = 's32[1]{0}', space=sflag, size = 0x4, scoped, tag = 'scoped memory for tpu_custom_call.1']
    #allocation5 [shape = 'u8[8192]{0}', space=vmem, size = 0x2000, scoped, tag = 'output window, operand 0, single buffered']
    %6 = vsyncpa [#allocation3], 0
    %7 = vsyncpa [#allocation4], 0
    // Predicated region
    $region2: #{tpu_custom_call.1} parent=1 // pred_check
      _
    $region3: #{tpu_custom_call.1} parent=1 // pred_check_branch
      %9 = sbr.rel (0) target = $region5
    $region4: #{tpu_custom_call.1} parent=1 // pred_region
      %s11 = ssub.s32 256, 256
      %12 = vsyncadd [#allocation3], %s11
      %s13 = sshll.u32 [#allocation2], 4
      %s14 = int_to_ptr.vmem [resolvable:$true] %s13
      %19 = dma.hbm_to_vmem [thread:$0]  %s0, 256, %s14, [#allocation3], 128, 128, 8
    $region5: #{tpu_custom_call.1} parent=1 // pred_fallthru
      _
    // Predicated region
    $region6: #{tpu_custom_call.1} parent=1 // pred_check
      _
    $region7: #{tpu_custom_call.1} parent=1 // pred_check_branch
      %21 = sbr.rel (0) target = $region9
    $region8: #{tpu_custom_call.1} parent=1 // pred_region
      %22 = dma.done [#allocation3], 256
    $region9: #{tpu_custom_call.1} parent=1 // pred_fallthru
      _
    %v23 = vld [vmem:[#allocation2] sm:$0xff]
    %v24 = vld [vmem:[#allocation2 + $0x8] sm:$0xff]
    %v25 = vxor.u32 %v23, 2147483648
    %v26 = vxor.u32 %v24, 2147483648
    %v27 = vmul.f32 %v25, 1.442695
    %v28 = vpow.pop %v27
    %v29 = vmul.f32 %v26, 1.442695
    %v30 = vpow.pop %v29
    %v31 = vadd.f32 %v28, 1.0
    %v32 = vadd.f32 %v30, 1.0
    %v33 = vrcp.pop %v31
    %v34 = vmul.f32 1.0, %v33
    %v35 = vrcp.pop %v32
    %v36 = vmul.f32 1.0, %v35
    %v37 = vmul.f32 %v23, %v34
    %v38 = vmul.f32 %v24, %v36
    %39 = vst [vmem:[#allocation5] sm:$0xff] %v37
    %40 = vst [vmem:[#allocation5 + $0x8] sm:$0xff] %v38
    // Predicated region
    $region10: #{tpu_custom_call.1} parent=1 // pred_check
      _
    $region11: #{tpu_custom_call.1} parent=1 // pred_check_branch
      %42 = sbr.rel (0) target = $region13
    $region12: #{tpu_custom_call.1} parent=1 // pred_region
      %s44 = ssub.s32 256, 256
      %45 = vsyncadd [#allocation4], %s44
      %s46 = sshll.u32 [#allocation5], 4
      %s47 = int_to_ptr.vmem [resolvable:$true] %s46
      %52 = dma.vmem_to_hbm [thread:$0]  %s47, 256, %s1, [#allocation4], 128, 128, 8
    $region13: #{tpu_custom_call.1} parent=1 // pred_fallthru
      _
    // Predicated region
    $region14: #{tpu_custom_call.1} parent=1 // pred_check
      _
    $region15: #{tpu_custom_call.1} parent=1 // pred_check_branch
      %54 = sbr.rel (0) target = $region17
    $region16: #{tpu_custom_call.1} parent=1 // pred_region
      %55 = dma.done [#allocation4], 256
    $region17: #{tpu_custom_call.1} parent=1 // pred_fallthru
      _
    %56 = vsyncpa [#allocation3], 1
    %57 = vsyncpa [#allocation4], 1

</llo_original>
